<compile_context>
chip_gen: v5e
topology: v5e:2x2
jax: 0.10.0
libtpu: 0.0.40
codegen_flags: <defaults>
</compile_context>

<pallas_src>
import functools

import jax
import jax.numpy as jnp
import numpy as np
from jax.experimental import pallas as pl
from jax.experimental.pallas import tpu as pltpu


def _cdiv(a, b):
    return -(-a // b)


def _round_up(a, b):
    return _cdiv(a, b) * b


def _vmem_capacity_bytes():
    try:
        return int(pltpu.get_tpu_info().vmem_capacity_bytes)
    except Exception:
        return 64 * 1024 * 1024   # conservative fallback (v7x per-TC physical)


def _focal_loss_kernel(x_ref, t_ref, w_ref, loss_ref, wsum_ref, *,
                       gamma, n_rows, tile_n):
    i = pl.program_id(0)

    @pl.when(i == 0)
    def _init():
        loss_ref[...] = jnp.zeros_like(loss_ref)
        wsum_ref[...] = jnp.zeros_like(wsum_ref)

    # ---- full-width work: cast, shift, exp, row-sum, one-hot gather ----
    x = x_ref[...].astype(jnp.float32)                       # (TN, C)
    m = jnp.max(x, axis=-1, keepdims=True)                   # (TN, 1)
    e = jnp.exp(x - m)                                       # (TN, C)
    s = jnp.sum(e, axis=-1, keepdims=True)                   # (TN, 1)

    tgt = t_ref[...]                                         # (TN, 1) int32
    col = jax.lax.broadcasted_iota(jnp.int32, x.shape, 1)
    # One-hot gather of the target logit. Use a select (NOT a multiply):
    # the ragged last tile may contain NaN/Inf garbage rows.
    picked_x = jnp.sum(jnp.where(col == tgt, x, 0.0),
                       axis=-1, keepdims=True)               # (TN, 1)

    # ---- narrow (TN, 1) work only from here on ----
    log_p = picked_x - m - jnp.log(s)                        # log_softmax @ target
    p = jnp.exp(log_p)                                       # prob @ target
    one_minus_p = 1.0 - p

    g = float(gamma)
    gi = int(g)
    if g == gi and 0 <= gi <= 8:
        # Integer gamma (default 2.0): repeated multiplies, no pow (log+exp).
        if gi == 0:
            ff = jnp.ones_like(one_minus_p)
        else:
            ff = one_minus_p
            for _ in range(gi - 1):
                ff = ff * one_minus_p
    else:
        ff = one_minus_p ** g
    focal = ff * log_p                                       # (TN, 1)

    row = i * tile_n + jax.lax.broadcasted_iota(jnp.int32, (tile_n, 1), 0)
    valid = row < n_rows                                     # mask ragged rows
    w = w_ref[...]                                           # (TN, 1) = weight[target]
    loss_vec = jnp.where(valid, w * (-focal), 0.0)
    w_vec = jnp.where(valid, w, 0.0)

    # Accumulate scalars directly into the resident (1,1) output blocks.
    loss_ref[...] += jnp.sum(loss_vec).reshape(1, 1)
    wsum_ref[...] += jnp.sum(w_vec).reshape(1, 1)


def focal_loss(logits, targets, weight=None, gamma=2.0, reduction="mean",
               tile_n=None):
    """Pallas implementation of FocalLoss.forward(input, target) for (N, C) logits."""
    N, C = logits.shape
    dtype = logits.dtype
    itemsize = jnp.dtype(dtype).itemsize
    row_align = 16 if itemsize < 4 else 8

    # Generation-aware VMEM sizing (v5e/v6e: 128 MiB, v7x: 64 MiB per TC).
    vmem_cap = _vmem_capacity_bytes()
    vmem_limit = min(100 * 1024 * 1024, int(vmem_cap * 0.8))

    if tile_n is None:
        c_lanes = _round_up(C, 128)          # in-VMEM lane padding of a row
        lane_row = 128 * 4                   # one (x, 1) f32 row padded to 128 lanes
        per_row = (2 * c_lanes * itemsize    # double-buffered logits stream
                   + 4 * c_lanes * 4         # wide f32 in-kernel temps
                   + 2 * 2 * lane_row        # double-buffered (TN,1) target / weight
                   + 6 * lane_row)           # live narrow (TN,1) f32 temps
        tile_n = max(row_align, (vmem_limit // 2) // per_row)
        tile_n = min(tile_n, 8192)
    tile_n = max(row_align, (tile_n // row_align) * row_align)
    tile_n = min(tile_n, _round_up(N, row_align))

    n_tiles = _cdiv(N, tile_n)

    targets_i32 = targets.astype(jnp.int32)
    targets_col = targets_i32.reshape(N, 1)
    if weight is None:
        # nn.NLLLoss with weight=None == all-ones weights (mean divides by N).
        w_picked = jnp.ones((N, 1), jnp.float32)
    else:
        w_picked = weight.astype(jnp.float32)[targets_i32].reshape(N, 1)

    kernel = functools.partial(_focal_loss_kernel, gamma=float(gamma),
                               n_rows=N, tile_n=tile_n)

    loss_out, wsum_out = pl.pallas_call(
        kernel,
        out_shape=(jax.ShapeDtypeStruct((1, 1), jnp.float32),
                   jax.ShapeDtypeStruct((1, 1), jnp.float32)),
        grid_spec=pltpu.PrefetchScalarGridSpec(
            num_scalar_prefetch=0,
            grid=(n_tiles,),
            in_specs=[
                # Full, unpadded class axis: contiguous DMA, no host copy.
                pl.BlockSpec((tile_n, C), lambda i: (i, 0)),
                pl.BlockSpec((tile_n, 1), lambda i: (i, 0)),
                pl.BlockSpec((tile_n, 1), lambda i: (i, 0)),
            ],
            out_specs=(
                pl.BlockSpec((1, 1), lambda i: (0, 0)),
                pl.BlockSpec((1, 1), lambda i: (0, 0)),
            ),
        ),
        compiler_params=pltpu.CompilerParams(
            dimension_semantics=("arbitrary",),
            vmem_limit_bytes=vmem_limit),
    )(logits, targets_col, w_picked)

    loss_sum = loss_out[0, 0]
    w_sum = wsum_out[0, 0]
    if reduction == "mean":
        return loss_sum / w_sum
    elif reduction == "sum":
        return loss_sum
    else:
        # TODO(synk): reduction='none' needs a per-sample output block; the
        # module's default ('mean') and 'sum' are supported.
        raise NotImplementedError(reduction)


def _focal_loss_ref(logits, targets, weight, gamma):
    """Plain-JAX reference matching the PyTorch semantics."""
    log_prob = jax.nn.log_softmax(logits.astype(jnp.float32), axis=-1)
    prob = jnp.exp(log_prob)
    focal = (1.0 - prob) ** gamma * log_prob
    picked = jnp.take_along_axis(
        focal, targets[:, None].astype(jnp.int32), axis=-1)[:, 0]
    if weight is None:
        w_picked = jnp.ones_like(picked)
    else:
        w_picked = weight.astype(jnp.float32)[targets]
    return jnp.sum(-w_picked * picked) / jnp.sum(w_picked)


if __name__ == "__main__":
    key = jax.random.PRNGKey(0)

    # Test 1: small f32 problem with class weights, default integer gamma.
    N1, C1 = 64, 32
    k1, k2, k3 = jax.random.split(key, 3)
    logits1 = jax.random.normal(k1, (N1, C1), dtype=jnp.float32)
    targets1 = jax.random.randint(k2, (N1,), 0, C1, dtype=jnp.int32)
    weight1 = jnp.linspace(0.5, 1.5, C1, dtype=jnp.float32)
    loss1 = jax.block_until_ready(
        focal_loss(logits1, targets1, weight=weight1, gamma=2.0))
    ref1 = _focal_loss_ref(logits1, targets1, weight1, 2.0)
    assert np.allclose(np.asarray(loss1), np.asarray(ref1),
                       rtol=1e-5, atol=1e-5), (float(loss1), float(ref1))

    # Test 2: bf16 logits, N not a multiple of the tile (ragged last block),
    # C not a multiple of 128, no class weights, multi-tile grid.
    N2, C2 = 333, 40
    k4, k5 = jax.random.split(k3)
    logits2 = jax.random.normal(k4, (N2, C2), dtype=jnp.bfloat16)
    targets2 = jax.random.randint(k5, (N2,), 0, C2, dtype=jnp.int32)
    loss2 = jax.block_until_ready(
        focal_loss(logits2, targets2, weight=None, gamma=2.0, tile_n=128))
    ref2 = _focal_loss_ref(logits2, targets2, None, 2.0)
    assert np.allclose(np.asarray(loss2), np.asarray(ref2),
                       rtol=1e-5, atol=1e-5), (float(loss2), float(ref2))

    # Test 3: fractional gamma exercises the pow path.
    loss3 = jax.block_until_ready(
        focal_loss(logits1, targets1, weight=weight1, gamma=1.5))
    ref3 = _focal_loss_ref(logits1, targets1, weight1, 1.5)
    assert np.allclose(np.asarray(loss3), np.asarray(ref3),
                       rtol=1e-5, atol=1e-5), (float(loss3), float(ref3))

    print("KERNEL_OK")
</pallas_src>

<mosaic_0001>
module attributes {stable_mosaic.version = 11 : i64} {
  func.func @_focal_loss_kernel(%arg0: i32, %arg1: memref<64x32xf32, #tpu.memory_space<vmem>>, %arg2: memref<64x1xi32, #tpu.memory_space<vmem>>, %arg3: memref<64x1xf32, #tpu.memory_space<vmem>>, %arg4: memref<1x1xf32, #tpu.memory_space<vmem>>, %arg5: memref<1x1xf32, #tpu.memory_space<vmem>>) attributes {dimension_semantics = [#tpu.dimension_semantics<arbitrary>], iteration_bounds = array<i64: 1>, scalar_prefetch = 0 : i64, scratch_operands = 0 : i64, tpu.core_type = #tpu.core_type<tc>, window_params = [{transform_indices = @transform_0, window_bounds = array<i64: 64, 32>}, {transform_indices = @transform_1, window_bounds = array<i64: 64, 1>}, {transform_indices = @transform_2, window_bounds = array<i64: 64, 1>}, {pipeline_mode = #tpu.pipeline_mode<synchronous>, transform_indices = @transform_3, window_bounds = array<i64: 1, 1>}, {pipeline_mode = #tpu.pipeline_mode<synchronous>, transform_indices = @transform_4, window_bounds = array<i64: 1, 1>}]} {
    %c0_i32 = arith.constant 0 : i32
    %0 = arith.cmpi eq, %arg0, %c0_i32 : i32
    %1 = arith.extui %0 : i1 to i32
    %c0_i32_0 = arith.constant 0 : i32
    %2 = arith.cmpi ne, %1, %c0_i32_0 : i32
    scf.if %2 {
      %cst_24 = arith.constant 0.000000e+00 : f32
      %57 = vector.broadcast %cst_24 : f32 to vector<1x1xf32>
      %c0_25 = arith.constant 0 : index
      %c0_26 = arith.constant 0 : index
      %58 = vector.load %arg4[%c0_25, %c0_26] : memref<1x1xf32, #tpu.memory_space<vmem>>, vector<1x1xf32>
      tpu.vector_store %arg4[%c0_25, %c0_26], %57 {strides = array<i32>} : memref<1x1xf32, #tpu.memory_space<vmem>>, vector<1x1xf32>,
      %cst_27 = arith.constant 0.000000e+00 : f32
      %59 = vector.broadcast %cst_27 : f32 to vector<1x1xf32>
      %c0_28 = arith.constant 0 : index
      %c0_29 = arith.constant 0 : index
      %60 = vector.load %arg5[%c0_28, %c0_29] : memref<1x1xf32, #tpu.memory_space<vmem>>, vector<1x1xf32>
      tpu.vector_store %arg5[%c0_28, %c0_29], %59 {strides = array<i32>} : memref<1x1xf32, #tpu.memory_space<vmem>>, vector<1x1xf32>,
    } else {
    }
    %c0 = arith.constant 0 : index
    %c0_1 = arith.constant 0 : index
    %3 = vector.load %arg1[%c0, %c0_1] : memref<64x32xf32, #tpu.memory_space<vmem>>, vector<64x32xf32>
    %cst = arith.constant dense<0xFF800000> : vector<64xf32>
    %4 = vector.multi_reduction <maximumf>, %3, %cst [1] : vector<64x32xf32> to vector<64xf32>
    %5 = vector.shape_cast %4 : vector<64xf32> to vector<64x1xf32>
    %6 = vector.broadcast %5 : vector<64x1xf32> to vector<64x32xf32>
    %7 = arith.subf %3, %6 : vector<64x32xf32>
    %8 = math.exp %7 : vector<64x32xf32>
    %cst_2 = arith.constant dense<0.000000e+00> : vector<64xf32>
    %9 = vector.multi_reduction <add>, %8, %cst_2 [1] : vector<64x32xf32> to vector<64xf32>
    %10 = vector.shape_cast %9 : vector<64xf32> to vector<64x1xf32>
    %c0_3 = arith.constant 0 : index
    %c0_4 = arith.constant 0 : index
    %11 = vector.load %arg2[%c0_3, %c0_4] : memref<64x1xi32, #tpu.memory_space<vmem>>, vector<64x1xi32>
    %12 = tpu.iota {dimensions = array<i32: 1>} : vector<64x32xi32>
    %13 = vector.broadcast %11 : vector<64x1xi32> to vector<64x32xi32>
    %14 = arith.cmpi eq, %12, %13 : vector<64x32xi32>
    %cst_5 = arith.constant 0.000000e+00 : f32
    %15 = vector.broadcast %cst_5 : f32 to vector<64x32xf32>
    %16 = arith.select %14, %3, %15 : vector<64x32xi1>, vector<64x32xf32>
    %cst_6 = arith.constant dense<0.000000e+00> : vector<64xf32>
    %17 = vector.multi_reduction <add>, %16, %cst_6 [1] : vector<64x32xf32> to vector<64xf32>
    %18 = vector.shape_cast %17 : vector<64xf32> to vector<64x1xf32>
    %19 = arith.subf %18, %5 : vector<64x1xf32>
    %20 = math.log %10 : vector<64x1xf32>
    %21 = arith.subf %19, %20 : vector<64x1xf32>
    %22 = math.exp %21 : vector<64x1xf32>
    %cst_7 = arith.constant 1.000000e+00 : f32
    %23 = vector.broadcast %cst_7 : f32 to vector<64x1xf32>
    %24 = arith.subf %23, %22 : vector<64x1xf32>
    %25 = arith.mulf %24, %24 : vector<64x1xf32>
    %26 = arith.mulf %25, %21 : vector<64x1xf32>
    %c64_i32 = arith.constant 64 : i32
    %27 = arith.muli %arg0, %c64_i32 : i32
    %28 = tpu.iota {dimensions = array<i32: 0>} : vector<64x1xi32>
    %29 = vector.broadcast %27 : i32 to vector<64x1xi32>
    %30 = arith.addi %29, %28 : vector<64x1xi32>
    %c64_i32_8 = arith.constant 64 : i32
    %31 = vector.broadcast %c64_i32_8 : i32 to vector<64x1xi32>
    %32 = arith.cmpi slt, %30, %31 : vector<64x1xi32>
    %c0_9 = arith.constant 0 : index
    %c0_10 = arith.constant 0 : index
    %33 = vector.load %arg3[%c0_9, %c0_10] : memref<64x1xf32, #tpu.memory_space<vmem>>, vector<64x1xf32>
    %cst_11 = arith.constant 0.000000e+00 : f32
    %34 = vector.broadcast %cst_11 : f32 to vector<64x1xf32>
    %35 = arith.subf %34, %26 : vector<64x1xf32>
    %36 = arith.mulf %33, %35 : vector<64x1xf32>
    %cst_12 = arith.constant 0.000000e+00 : f32
    %37 = vector.broadcast %cst_12 : f32 to vector<64x1xf32>
    %38 = arith.select %32, %36, %37 : vector<64x1xi1>, vector<64x1xf32>
    %cst_13 = arith.constant 0.000000e+00 : f32
    %39 = vector.broadcast %cst_13 : f32 to vector<64x1xf32>
    %40 = arith.select %32, %33, %39 : vector<64x1xi1>, vector<64x1xf32>
    %c0_14 = arith.constant 0 : index
    %c0_15 = arith.constant 0 : index
    %41 = vector.load %arg4[%c0_14, %c0_15] : memref<1x1xf32, #tpu.memory_space<vmem>>, vector<1x1xf32>
    %42 = vector.shape_cast %38 : vector<64x1xf32> to vector<1x64x1xf32>
    %cst_16 = arith.constant dense<0.000000e+00> : vector<1xf32>
    %43 = vector.multi_reduction <add>, %42, %cst_16 [1, 2] : vector<1x64x1xf32> to vector<1xf32>
    %44 = vector.shape_cast %43 : vector<1xf32> to vector<1x1x1xf32>
    %45 = vector.extract %44[0, 0, 0] : f32 from vector<1x1x1xf32>
    %46 = vector.broadcast %45 : f32 to vector<1x1xf32>
    %47 = arith.addf %41, %46 : vector<1x1xf32>
    %c0_17 = arith.constant 0 : index
    %c0_18 = arith.constant 0 : index
    %48 = vector.load %arg4[%c0_17, %c0_18] : memref<1x1xf32, #tpu.memory_space<vmem>>, vector<1x1xf32>
    tpu.vector_store %arg4[%c0_17, %c0_18], %47 {strides = array<i32>} : memref<1x1xf32, #tpu.memory_space<vmem>>, vector<1x1xf32>,
    %c0_19 = arith.constant 0 : index
    %c0_20 = arith.constant 0 : index
    %49 = vector.load %arg5[%c0_19, %c0_20] : memref<1x1xf32, #tpu.memory_space<vmem>>, vector<1x1xf32>
    %50 = vector.shape_cast %40 : vector<64x1xf32> to vector<1x64x1xf32>
    %cst_21 = arith.constant dense<0.000000e+00> : vector<1xf32>
    %51 = vector.multi_reduction <add>, %50, %cst_21 [1, 2] : vector<1x64x1xf32> to vector<1xf32>
    %52 = vector.shape_cast %51 : vector<1xf32> to vector<1x1x1xf32>
    %53 = vector.extract %52[0, 0, 0] : f32 from vector<1x1x1xf32>
    %54 = vector.broadcast %53 : f32 to vector<1x1xf32>
    %55 = arith.addf %49, %54 : vector<1x1xf32>
    %c0_22 = arith.constant 0 : index
    %c0_23 = arith.constant 0 : index
    %56 = vector.load %arg5[%c0_22, %c0_23] : memref<1x1xf32, #tpu.memory_space<vmem>>, vector<1x1xf32>
    tpu.vector_store %arg5[%c0_22, %c0_23], %55 {strides = array<i32>} : memref<1x1xf32, #tpu.memory_space<vmem>>, vector<1x1xf32>,
    return
  }
  func.func @transform_0(%arg0: i32) -> (i32, i32) {
    %c0_i32 = arith.constant 0 : i32
    %c0_i32_0 = arith.constant 0 : i32
    return %arg0, %c0_i32 : i32, i32
  }
  func.func @transform_1(%arg0: i32) -> (i32, i32) {
    %c0_i32 = arith.constant 0 : i32
    %c0_i32_0 = arith.constant 0 : i32
    return %arg0, %c0_i32 : i32, i32
  }
  func.func @transform_2(%arg0: i32) -> (i32, i32) {
    %c0_i32 = arith.constant 0 : i32
    %c0_i32_0 = arith.constant 0 : i32
    return %arg0, %c0_i32 : i32, i32
  }
  func.func @transform_3(%arg0: i32) -> (i32, i32) {
    %c0_i32 = arith.constant 0 : i32
    %c0_i32_0 = arith.constant 0 : i32
    %c0_i32_1 = arith.constant 0 : i32
    return %c0_i32, %c0_i32_0 : i32, i32
  }
  func.func @transform_4(%arg0: i32) -> (i32, i32) {
    %c0_i32 = arith.constant 0 : i32
    %c0_i32_0 = arith.constant 0 : i32
    %c0_i32_1 = arith.constant 0 : i32
    return %c0_i32, %c0_i32_0 : i32, i32
  }
}

</mosaic_0001>

<llo_original>
// kernel: tpu_custom_call.1
$region0: #{tpu_custom_call.1}
  #allocation0 [shape = 'u32[]', space=smem, size = 0x4, offset = 0x4, fixed_abs, tag = 'smem constant byte address 0x4 - core index']
  #allocation1 [shape = 'u32[72,128]{1,0:T(1,128)}', space=vmem, size = 0x9000, scoped, tag = 'internal scratch']
  %s0 = inlined_call_operand.vmem [shape: f32[64,32], index: 0, kind: input, shape index: {}]
  %s1 = inlined_call_operand.vmem [shape: s32[64,1], index: 1, kind: input, shape index: {}]
  %s2 = inlined_call_operand.vmem [shape: f32[64,1], index: 2, kind: input, shape index: {}]
  %s3 = inlined_call_operand.hbm [shape: f32[1,1], index: 3, kind: output, shape index: {0}]
  %s4 = inlined_call_operand.hbm [shape: f32[1,1], index: 4, kind: output, shape index: {1}]
  %5 = xla_tuple %s3, %s4
  %s6 = sld [smem:[#allocation0]]
  $region34: #{tpu_custom_call.1} parent=0
    _
  %s8 = ssub.s32 1, %s6
  %s9 = scalar_select 0, %s8, %s6
  $region1: #{tpu_custom_call.1} parent=0
    #allocation2 [shape = 'u8[512]{0}', space=vmem, size = 0x400, scoped, tag = 'output window, operand 0, single buffered']
    #allocation3 [shape = 's32[1]{0}', space=sflag, size = 0x4, scoped, tag = 'scoped memory for tpu_custom_call.1']
    #allocation4 [shape = 'u8[512]{0}', space=vmem, size = 0x400, scoped, tag = 'output window, operand 1, single buffered']
    #allocation5 [shape = 's32[1]{0}', space=sflag, size = 0x4, scoped, tag = 'scoped memory for tpu_custom_call.1']
    %10 = vsyncpa [#allocation3], 0
    %11 = vsyncpa [#allocation5], 0
    // Predicated region
    $region2: #{tpu_custom_call.1} parent=1 // pred_check
      _
    $region3: #{tpu_custom_call.1} parent=1 // pred_check_branch
      %13 = sbr.rel (0) target = $region5
    $region4: #{tpu_custom_call.1} parent=1 // pred_region
      _
    $region5: #{tpu_custom_call.1} parent=1 // pred_fallthru
      _
    // Predicated region
    $region6: #{tpu_custom_call.1} parent=1 // pred_check
      _
    $region7: #{tpu_custom_call.1} parent=1 // pred_check_branch
      %15 = sbr.rel (0) target = $region9
    $region8: #{tpu_custom_call.1} parent=1 // pred_region
      _
    $region9: #{tpu_custom_call.1} parent=1 // pred_fallthru
      _
    // Predicated region
    $region10: #{tpu_custom_call.1} parent=1 // pred_check
      _
    $region11: #{tpu_custom_call.1} parent=1 // pred_check_branch
      %17 = sbr.rel (0) target = $region13
    $region12: #{tpu_custom_call.1} parent=1 // pred_region
      _
    $region13: #{tpu_custom_call.1} parent=1 // pred_fallthru
      _
    %p18 = scmp.eq.s32.totalorder 0, 0
    // Predicated region
    $region14: #{tpu_custom_call.1} parent=1 // pred_check
      %p19 = pneg %p18
    $region15: #{tpu_custom_call.1} parent=1 // pred_check_branch
      %21 = sbr.rel (%p19) target = $region17
    $region16: #{tpu_custom_call.1} parent=1 // pred_region
      %vm22 = vcmask 0
      %23 = vst.msk [vmem:[#allocation2] sm:$0x1] %vm22, 0.0
      %24 = vst.msk [vmem:[#allocation4] sm:$0x1] %vm22, 0.0
    $region17: #{tpu_custom_call.1} parent=1 // pred_fallthru
      _
    %v25 = vld [vmem:[%s0] sm:$0xff]
    %v26 = vld [vmem:[%s0 + $0x8] sm:$0xff]
    %v27 = vld [vmem:[%s0 + $0x10] sm:$0xff]
    %v28 = vld [vmem:[%s0 + $0x18] sm:$0xff]
    %v29 = vld [vmem:[%s0 + $0x20] sm:$0xff]
    %v30 = vld [vmem:[%s0 + $0x28] sm:$0xff]
    %v31 = vld [vmem:[%s0 + $0x30] sm:$0xff]
    %v32 = vld [vmem:[%s0 + $0x38] sm:$0xff]
    %vm33 = vcmask 261120
    %v34 = vsel %vm33, %v25, -inf
    %35 = vmax.xlane.f32.xlu0 %v34
    %v36 = vpop.xlane.xlu0 %35
    %v37 = vsel %vm33, %v26, -inf
    %38 = vmax.xlane.f32.xlu0 %v37
    %v39 = vpop.xlane.xlu0 %38
    %v40 = vsel %vm33, %v27, -inf
    %41 = vmax.xlane.f32.xlu0 %v40
    %v42 = vpop.xlane.xlu0 %41
    %v43 = vsel %vm33, %v28, -inf
    %44 = vmax.xlane.f32.xlu0 %v43
    %v45 = vpop.xlane.xlu0 %44
    %v46 = vsel %vm33, %v29, -inf
    %47 = vmax.xlane.f32.xlu0 %v46
    %v48 = vpop.xlane.xlu0 %47
    %v49 = vsel %vm33, %v30, -inf
    %50 = vmax.xlane.f32.xlu0 %v49
    %v51 = vpop.xlane.xlu0 %50
    %v52 = vsel %vm33, %v31, -inf
    %53 = vmax.xlane.f32.xlu0 %v52
    %v54 = vpop.xlane.xlu0 %53
    %v55 = vsel %vm33, %v32, -inf
    %56 = vmax.xlane.f32.xlu0 %v55
    %v57 = vpop.xlane.xlu0 %56
    %v58 = vsub.f32 %v25, %v36
    %v59 = vsub.f32 %v26, %v39
    %v60 = vsub.f32 %v27, %v42
    %v61 = vsub.f32 %v28, %v45
    %v62 = vsub.f32 %v29, %v48
    %v63 = vsub.f32 %v30, %v51
    %v64 = vsub.f32 %v31, %v54
    %v65 = vsub.f32 %v32, %v57
    %v66 = vmul.f32 %v58, 1.442695
    %v67 = vpow.pop %v66
    %v68 = vmul.f32 %v59, 1.442695
    %v69 = vpow.pop %v68
    %v70 = vmul.f32 %v60, 1.442695
    %v71 = vpow.pop %v70
    %v72 = vmul.f32 %v61, 1.442695
    %v73 = vpow.pop %v72
    %v74 = vmul.f32 %v62, 1.442695
    %v75 = vpow.pop %v74
    %v76 = vmul.f32 %v63, 1.442695
    %v77 = vpow.pop %v76
    %v78 = vmul.f32 %v64, 1.442695
    %v79 = vpow.pop %v78
    %v80 = vmul.f32 %v65, 1.442695
    %v81 = vpow.pop %v80
    %v82 = vsel %vm33, %v67, 0.0
    %83 = vadd.xlane.f32.xlu0 %v82
    %v84 = vpop.xlane.xlu0 %83
    %v85 = vsel %vm33, %v69, 0.0
    %86 = vadd.xlane.f32.xlu0 %v85
    %v87 = vpop.xlane.xlu0 %86
    %v88 = vsel %vm33, %v71, 0.0
    %89 = vadd.xlane.f32.xlu0 %v88
    %v90 = vpop.xlane.xlu0 %89
    %v91 = vsel %vm33, %v73, 0.0
    %92 = vadd.xlane.f32.xlu0 %v91
    %v93 = vpop.xlane.xlu0 %92
    %v94 = vsel %vm33, %v75, 0.0
    %95 = vadd.xlane.f32.xlu0 %v94
    %v96 = vpop.xlane.xlu0 %95
    %v97 = vsel %vm33, %v77, 0.0
    %98 = vadd.xlane.f32.xlu0 %v97
    %v99 = vpop.xlane.xlu0 %98
    %v100 = vsel %vm33, %v79, 0.0
    %101 = vadd.xlane.f32.xlu0 %v100
    %v102 = vpop.xlane.xlu0 %101
    %v103 = vsel %vm33, %v81, 0.0
    %104 = vadd.xlane.f32.xlu0 %v103
    %v105 = vpop.xlane.xlu0 %104
    %v106 = vld [vmem:[%s1] sm:$0xff]
    %v107 = vld [vmem:[%s1 + $0x8] sm:$0xff]
    %v108 = vld [vmem:[%s1 + $0x10] sm:$0xff]
    %v109 = vld [vmem:[%s1 + $0x18] sm:$0xff]
    %v110 = vld [vmem:[%s1 + $0x20] sm:$0xff]
    %v111 = vld [vmem:[%s1 + $0x28] sm:$0xff]
    %v112 = vld [vmem:[%s1 + $0x30] sm:$0xff]
    %v113 = vld [vmem:[%s1 + $0x38] sm:$0xff]
    %v114 = vlaneseq
    %v115 = vand.u32 %v114, 127
    %116 = vset.pattern.permute.xlu0 0
    %117 = vperm.xlu0 %116, %v106
    %v118 = vpop.permute.xlu0 %117
    %119 = vset.pattern.permute.xlu0 0
    %120 = vperm.xlu0 %119, %v107
    %v121 = vpop.permute.xlu0 %120
    %122 = vset.pattern.permute.xlu0 0
    %123 = vperm.xlu0 %122, %v108
    %v124 = vpop.permute.xlu0 %123
    %125 = vset.pattern.permute.xlu0 0
    %126 = vperm.xlu0 %125, %v109
    %v127 = vpop.permute.xlu0 %126
    %128 = vset.pattern.permute.xlu0 0
    %129 = vperm.xlu0 %128, %v110
    %v130 = vpop.permute.xlu0 %129
    %131 = vset.pattern.permute.xlu0 0
    %132 = vperm.xlu0 %131, %v111
    %v133 = vpop.permute.xlu0 %132
    %134 = vset.pattern.permute.xlu0 0
    %135 = vperm.xlu0 %134, %v112
    %v136 = vpop.permute.xlu0 %135
    %137 = vset.pattern.permute.xlu0 0
    %138 = vperm.xlu0 %137, %v113
    %v139 = vpop.permute.xlu0 %138
    %vm140 = vcmp.eq.s32.totalorder %v115, %v118
    %vm141 = vcmp.eq.s32.totalorder %v115, %v121
    %vm142 = vcmp.eq.s32.totalorder %v115, %v124
    %vm143 = vcmp.eq.s32.totalorder %v115, %v127
    %vm144 = vcmp.eq.s32.totalorder %v115, %v130
    %vm145 = vcmp.eq.s32.totalorder %v115, %v133
    %vm146 = vcmp.eq.s32.totalorder %v115, %v136
    %vm147 = vcmp.eq.s32.totalorder %v115, %v139
    %v148 = vsel %vm140, %v25, 0.0
    %v149 = vsel %vm141, %v26, 0.0
    %v150 = vsel %vm142, %v27, 0.0
    %v151 = vsel %vm143, %v28, 0.0
    %v152 = vsel %vm144, %v29, 0.0
    %v153 = vsel %vm145, %v30, 0.0
    %v154 = vsel %vm146, %v31, 0.0
    %v155 = vsel %vm147, %v32, 0.0
    %v156 = vsel %vm33, %v148, 0.0
    %157 = vadd.xlane.f32.xlu0 %v156
    %v158 = vpop.xlane.xlu0 %157
    %v159 = vsel %vm33, %v149, 0.0
    %160 = vadd.xlane.f32.xlu0 %v159
    %v161 = vpop.xlane.xlu0 %160
    %v162 = vsel %vm33, %v150, 0.0
    %163 = vadd.xlane.f32.xlu0 %v162
    %v164 = vpop.xlane.xlu0 %163
    %v165 = vsel %vm33, %v151, 0.0
    %166 = vadd.xlane.f32.xlu0 %v165
    %v167 = vpop.xlane.xlu0 %166
    %v168 = vsel %vm33, %v152, 0.0
    %169 = vadd.xlane.f32.xlu0 %v168
    %v170 = vpop.xlane.xlu0 %169
    %v171 = vsel %vm33, %v153, 0.0
    %172 = vadd.xlane.f32.xlu0 %v171
    %v173 = vpop.xlane.xlu0 %172
    %v174 = vsel %vm33, %v154, 0.0
    %175 = vadd.xlane.f32.xlu0 %v174
    %v176 = vpop.xlane.xlu0 %175
    %v177 = vsel %vm33, %v155, 0.0
    %178 = vadd.xlane.f32.xlu0 %v177
    %v179 = vpop.xlane.xlu0 %178
    %v180 = vsub.f32 %v158, %v36
    %v181 = vsub.f32 %v161, %v39
    %v182 = vsub.f32 %v164, %v42
    %v183 = vsub.f32 %v167, %v45
    %v184 = vsub.f32 %v170, %v48
    %v185 = vsub.f32 %v173, %v51
    %v186 = vsub.f32 %v176, %v54
    %v187 = vsub.f32 %v179, %v57
    %v188 = vlog2.pop %v84
    %v189 = vmul.f32 %v188, 0.6931472
    %v190 = vlog2.pop %v87
    %v191 = vmul.f32 %v190, 0.6931472
    %v192 = vlog2.pop %v90
    %v193 = vmul.f32 %v192, 0.6931472
    %v194 = vlog2.pop %v93
    %v195 = vmul.f32 %v194, 0.6931472
    %v196 = vlog2.pop %v96
    %v197 = vmul.f32 %v196, 0.6931472
    %v198 = vlog2.pop %v99
    %v199 = vmul.f32 %v198, 0.6931472
    %v200 = vlog2.pop %v102
    %v201 = vmul.f32 %v200, 0.6931472
    %v202 = vlog2.pop %v105
    %v203 = vmul.f32 %v202, 0.6931472
    %v204 = vsub.f32 %v180, %v189
    %v205 = vsub.f32 %v181, %v191
    %v206 = vsub.f32 %v182, %v193
    %v207 = vsub.f32 %v183, %v195
    %v208 = vsub.f32 %v184, %v197
    %v209 = vsub.f32 %v185, %v199
    %v210 = vsub.f32 %v186, %v201
    %v211 = vsub.f32 %v187, %v203
    %v212 = vmul.f32 %v204, 1.442695
    %v213 = vpow.pop %v212
    %v214 = vmul.f32 %v205, 1.442695
    %v215 = vpow.pop %v214
    %v216 = vmul.f32 %v206, 1.442695
    %v217 = vpow.pop %v216
    %v218 = vmul.f32 %v207, 1.442695
    %v219 = vpow.pop %v218
    %v220 = vmul.f32 %v208, 1.442695
    %v221 = vpow.pop %v220
    %v222 = vmul.f32 %v209, 1.442695
    %v223 = vpow.pop %v222
    %v224 = vmul.f32 %v210, 1.442695
    %v225 = vpow.pop %v224
    %v226 = vmul.f32 %v211, 1.442695
    %v227 = vpow.pop %v226
    %v228 = vsub.f32 1.0, %v213
    %v229 = vsub.f32 1.0, %v215
    %v230 = vsub.f32 1.0, %v217
    %v231 = vsub.f32 1.0, %v219
    %v232 = vsub.f32 1.0, %v221
    %v233 = vsub.f32 1.0, %v223
    %v234 = vsub.f32 1.0, %v225
    %v235 = vsub.f32 1.0, %v227
    %v236 = vmul.f32 %v228, %v228
    %v237 = vmul.f32 %v229, %v229
    %v238 = vmul.f32 %v230, %v230
    %v239 = vmul.f32 %v231, %v231
    %v240 = vmul.f32 %v232, %v232
    %v241 = vmul.f32 %v233, %v233
    %v242 = vmul.f32 %v234, %v234
    %v243 = vmul.f32 %v235, %v235
    %v244 = vmul.f32 %v236, %v204
    %v245 = vmul.f32 %v237, %v205
    %v246 = vmul.f32 %v238, %v206
    %v247 = vmul.f32 %v239, %v207
    %v248 = vmul.f32 %v240, %v208
    %v249 = vmul.f32 %v241, %v209
    %v250 = vmul.f32 %v242, %v210
    %v251 = vmul.f32 %v243, %v211
    %s252 = smul.u32 0, 64
    %v253 = vlaneseq
    %v254 = vshrl.u32 %v253, 7
    %v255 = vadd.s32 %v254, 8
    %v256 = vadd.s32 %v254, 16
    %v257 = vadd.s32 %v254, 24
    %v258 = vadd.s32 %v254, 32
    %v259 = vadd.s32 %v254, 40
    %v260 = vadd.s32 %v254, 48
    %v261 = vadd.s32 %v254, 56
    %v262 = vstv %s252
    %v263 = vadd.s32 %v262, %v254
    %v264 = vadd.s32 %v262, %v255
    %v265 = vadd.s32 %v262, %v256
    %v266 = vadd.s32 %v262, %v257
    %v267 = vadd.s32 %v262, %v258
    %v268 = vadd.s32 %v262, %v259
    %v269 = vadd.s32 %v262, %v260
    %v270 = vadd.s32 %v262, %v261
    %vm271 = vcmp.lt.s32.totalorder %v263, 64
    %vm272 = vcmp.lt.s32.totalorder %v264, 64
    %vm273 = vcmp.lt.s32.totalorder %v265, 64
    %vm274 = vcmp.lt.s32.totalorder %v266, 64
    %vm275 = vcmp.lt.s32.totalorder %v267, 64
    %vm276 = vcmp.lt.s32.totalorder %v268, 64
    %vm277 = vcmp.lt.s32.totalorder %v269, 64
    %vm278 = vcmp.lt.s32.totalorder %v270, 64
    %v279 = vld [vmem:[%s2] sm:$0xff]
    %v280 = vld [vmem:[%s2 + $0x8] sm:$0xff]
    %v281 = vld [vmem:[%s2 + $0x10] sm:$0xff]
    %v282 = vld [vmem:[%s2 + $0x18] sm:$0xff]
    %v283 = vld [vmem:[%s2 + $0x20] sm:$0xff]
    %v284 = vld [vmem:[%s2 + $0x28] sm:$0xff]
    %v285 = vld [vmem:[%s2 + $0x30] sm:$0xff]
    %v286 = vld [vmem:[%s2 + $0x38] sm:$0xff]
    %v287 = vsub.f32 0.0, %v244
    %v288 = vsub.f32 0.0, %v245
    %v289 = vsub.f32 0.0, %v246
    %v290 = vsub.f32 0.0, %v247
    %v291 = vsub.f32 0.0, %v248
    %v292 = vsub.f32 0.0, %v249
    %v293 = vsub.f32 0.0, %v250
    %v294 = vsub.f32 0.0, %v251
    %v295 = vmul.f32 %v279, %v287
    %v296 = vmul.f32 %v280, %v288
    %v297 = vmul.f32 %v281, %v289
    %v298 = vmul.f32 %v282, %v290
    %v299 = vmul.f32 %v283, %v291
    %v300 = vmul.f32 %v284, %v292
    %v301 = vmul.f32 %v285, %v293
    %v302 = vmul.f32 %v286, %v294
    %v303 = vsel %vm271, %v295, 0.0
    %v304 = vsel %vm272, %v296, 0.0
    %v305 = vsel %vm273, %v297, 0.0
    %v306 = vsel %vm274, %v298, 0.0
    %v307 = vsel %vm275, %v299, 0.0
    %v308 = vsel %vm276, %v300, 0.0
    %v309 = vsel %vm277, %v301, 0.0
    %v310 = vsel %vm278, %v302, 0.0
    %v311 = vsel %vm271, %v279, 0.0
    %v312 = vsel %vm272, %v280, 0.0
    %v313 = vsel %vm273, %v281, 0.0
    %v314 = vsel %vm274, %v282, 0.0
    %v315 = vsel %vm275, %v283, 0.0
    %v316 = vsel %vm276, %v284, 0.0
    %v317 = vsel %vm277, %v285, 0.0
    %v318 = vsel %vm278, %v286, 0.0
    %v319 = vld [vmem:[#allocation2] sm:$0x1]
    %vm320 = vcmask 7168
    %v321 = vsel %vm320, %v303, 0.0
    %v322 = vsel %vm320, %v304, 0.0
    %v323 = vadd.f32 %v321, %v322
    %v324 = vsel %vm320, %v305, 0.0
    %v325 = vadd.f32 %v323, %v324
    %v326 = vsel %vm320, %v306, 0.0
    %v327 = vadd.f32 %v325, %v326
    %v328 = vsel %vm320, %v307, 0.0
    %v329 = vadd.f32 %v327, %v328
    %v330 = vsel %vm320, %v308, 0.0
    %v331 = vadd.f32 %v329, %v330
    %v332 = vsel %vm320, %v309, 0.0
    %v333 = vadd.f32 %v331, %v332
    %v334 = vsel %vm320, %v310, 0.0
    %v335 = vadd.f32 %v333, %v334
    %336 = vadd.xlane.f32.xlu0 %v335
    %v337 = vpop.xlane.xlu0 %336
    %v338 = vrot.slane %v337, 4
    %v339 = vadd.f32 %v337, %v338
    %v340 = vrot.slane %v339, 2
    %v341 = vadd.f32 %v339, %v340
    %v342 = vrot.slane %v341, 1
    %v343 = vadd.f32 %v341, %v342
    %s344 = vtos %v343
    %v345 = vstv %s344
    %v346 = vadd.f32 %v319, %v345
    %vm347 = vcmask 0
    %348 = vst.msk [vmem:[#allocation2] sm:$0x1] %vm347, %v346
    %v349 = vld [vmem:[#allocation4] sm:$0x1]
    %v350 = vsel %vm320, %v311, 0.0
    %v351 = vsel %vm320, %v312, 0.0
    %v352 = vadd.f32 %v350, %v351
    %v353 = vsel %vm320, %v313, 0.0
    %v354 = vadd.f32 %v352, %v353
    %v355 = vsel %vm320, %v314, 0.0
    %v356 = vadd.f32 %v354, %v355
    %v357 = vsel %vm320, %v315, 0.0
    %v358 = vadd.f32 %v356, %v357
    %v359 = vsel %vm320, %v316, 0.0
    %v360 = vadd.f32 %v358, %v359
    %v361 = vsel %vm320, %v317, 0.0
    %v362 = vadd.f32 %v360, %v361
    %v363 = vsel %vm320, %v318, 0.0
    %v364 = vadd.f32 %v362, %v363
    %365 = vadd.xlane.f32.xlu0 %v364
    %v366 = vpop.xlane.xlu0 %365
    %v367 = vrot.slane %v366, 4
    %v368 = vadd.f32 %v366, %v367
    %v369 = vrot.slane %v368, 2
    %v370 = vadd.f32 %v368, %v369
    %v371 = vrot.slane %v370, 1
    %v372 = vadd.f32 %v370, %v371
    %s373 = vtos %v372
    %v374 = vstv %s373
    %v375 = vadd.f32 %v349, %v374
    %376 = vst.msk [vmem:[#allocation4] sm:$0x1] %vm347, %v375
    // Predicated region
    $region18: #{tpu_custom_call.1} parent=1 // pred_check
      _
    $region19: #{tpu_custom_call.1} parent=1 // pred_check_branch
      %378 = sbr.rel (0) target = $region21
    $region20: #{tpu_custom_call.1} parent=1 // pred_region
      %380 = vsyncadd [#allocation3], 0
      %s382 = sshll.u32 [#allocation2], 4
      %s383 = int_to_ptr.vmem [resolvable:$true] %s382
      %s384 = sshll.u32 %s3, 4
      %s385 = int_to_ptr.hbm [resolvable:$true] %s384
      %387 = dma.vmem_to_hbm [thread:$0]  %s383, 16, %s385, [#allocation3]
    $region21: #{tpu_custom_call.1} parent=1 // pred_fallthru
      _
    // Predicated region
    $region22: #{tpu_custom_call.1} parent=1 // pred_check
      _
    $region23: #{tpu_custom_call.1} parent=1 // pred_check_branch
      %389 = sbr.rel (0) target = $region25
    $region24: #{tpu_custom_call.1} parent=1 // pred_region
      %391 = vsyncadd [#allocation5], 0
      %s393 = sshll.u32 [#allocation4], 4
      %s394 = int_to_ptr.vmem [resolvable:$true] %s393
      %s395 = sshll.u32 %s4, 4
      %s396 = int_to_ptr.hbm [resolvable:$true] %s395
      %398 = dma.vmem_to_hbm [thread:$0]  %s394, 16, %s396, [#allocation5]
    $region25: #{tpu_custom_call.1} parent=1 // pred_fallthru
      _
    // Predicated region
    $region26: #{tpu_custom_call.1} parent=1 // pred_check
      _
    $region27: #{tpu_custom_call.1} parent=1 // pred_check_branch
      %400 = sbr.rel (0) target = $region29
    $region28: #{tpu_custom_call.1} parent=1 // pred_region
      %402 = dma.done [#allocation3], 16
    $region29: #{tpu_custom_call.1} parent=1 // pred_fallthru
      _
    // Predicated region
    $region30: #{tpu_custom_call.1} parent=1 // pred_check
      _
    $region31: #{tpu_custom_call.1} parent=1 // pred_check_branch
      %404 = sbr.rel (0) target = $region33
    $region32: #{tpu_custom_call.1} parent=1 // pred_region
      %406 = dma.done [#allocation5], 16
    $region33: #{tpu_custom_call.1} parent=1 // pred_fallthru
      _
    %407 = vsyncpa [#allocation3], 1
    %408 = vsyncpa [#allocation5], 1

</llo_original>
